<compile_context>
chip_gen: v7x
topology: tpu7x:2x2x1
jax: 0.10.0
libtpu: 0.0.40
codegen_flags: <defaults>
</compile_context>

<pallas_src>
import functools
from itertools import combinations

import numpy as np
import jax
import jax.numpy as jnp
from jax.experimental import pallas as pl
from jax.experimental.pallas import tpu as pltpu


# ----------------------------------------------------------------------------
# small helpers
# ----------------------------------------------------------------------------
def _round_up(n, m):
    return ((n + m - 1) // m) * m


def _pad_np(a, rows, cols):
    a = np.asarray(a, np.float32)
    return np.pad(a, ((0, rows - a.shape[0]), (0, cols - a.shape[1])))


# ----------------------------------------------------------------------------
# Single-buffered constants: probe once (eagerly, outside jit) whether this
# Pallas build accepts pipeline_mode=pl.Buffered(1) on a constant-index-map
# input; otherwise fall back to the default double-buffering.  Halves the VMEM
# held by resident weights / select tables (most valuable on v7x's 64 MiB).
# ----------------------------------------------------------------------------
_SINGLE_BUFFER_MODE = "unprobed"


def _probe_single_buffer_mode():
    def _k(x_ref, w_ref, o_ref):
        o_ref[...] = x_ref[...] + w_ref[...]

    try:
        mode = pl.Buffered(1)
        x = jnp.zeros((16, 128), jnp.float32)
        w = jnp.ones((8, 128), jnp.float32)
        f = pl.pallas_call(
            _k,
            out_shape=jax.ShapeDtypeStruct((16, 128), jnp.float32),
            grid=(2,),
            in_specs=[pl.BlockSpec((8, 128), lambda i: (i, 0)),
                      pl.BlockSpec((8, 128), lambda i: (0, 0),
                                   pipeline_mode=mode)],
            out_specs=pl.BlockSpec((8, 128), lambda i: (i, 0)),
        )
        y = jax.block_until_ready(f(x, w))
        if not np.allclose(np.asarray(y), 1.0):
            return None
        return mode
    except Exception:
        return None


def _single_buffer_mode():
    global _SINGLE_BUFFER_MODE
    if _SINGLE_BUFFER_MODE == "unprobed":
        _SINGLE_BUFFER_MODE = _probe_single_buffer_mode()
    return _SINGLE_BUFFER_MODE


def _const_spec(shape, mode):
    """BlockSpec for an operand that is identical at every grid step."""
    index_map = lambda *_: (0,) * len(shape)
    if mode is None:
        return pl.BlockSpec(shape, index_map)
    return pl.BlockSpec(shape, index_map, pipeline_mode=mode)


# ----------------------------------------------------------------------------
# Static recursion plan:  fk(S) = (1/|S|) * sum_{i in S} g([h(X_i), fk(S\{i})])
# fk is symmetric in S -> enumerate distinct subsets per size once.  Rows for
# each subset are emitted contiguously (k consecutive rows) so the segment-mean
# is a contiguous reduce, never a scatter.
# ----------------------------------------------------------------------------
def build_plan(adjacency_list):
    L = len(adjacency_list)
    degs = [len(n) for n in adjacency_list]
    max_k = max(degs) if degs else 0

    levels = []
    prev_idx_map = None
    for k in range(2, max_k + 1):
        needed = set()
        for nbrs in adjacency_list:
            s = tuple(sorted(nbrs))
            if len(s) >= k:
                needed.update(combinations(s, k))
        subsets = sorted(needed)
        idx_map = {s: i for i, s in enumerate(subsets)}
        h_idx, child_idx = [], []
        for s in subsets:                       # subset-major -> contiguous k rows
            for elem in s:
                child = tuple(x for x in s if x != elem)
                h_idx.append(elem)
                child_idx.append(child[0] if k == 2 else prev_idx_map[child])
        levels.append(dict(
            k=k, S=len(subsets), idx_map=idx_map,
            h_idx=np.asarray(h_idx, np.int32),
            child_idx=np.asarray(child_idx, np.int32)))
        prev_idx_map = idx_map

    # Flat gather index for E rows out of concat([H, F2, F3, ..., zeros_row]).
    offsets, off = {}, L
    for lvl in levels:
        offsets[lvl["k"]] = off
        off += lvl["S"]
    zero_row = off
    e_idx = np.full((L,), zero_row, np.int32)   # degree-0 nodes -> zeros row
    for l, nbrs in enumerate(adjacency_list):
        s = tuple(sorted(nbrs))
        d = len(s)
        if d == 1:
            e_idx[l] = s[0]                     # fk of a single index is h(X_neighbor)
        elif d >= 2:
            e_idx[l] = offsets[d] + levels[d - 2]["idx_map"][s]
    return dict(levels=levels, e_idx=e_idx)


# ============================================================================
# PRIMARY PATH: the whole forward in ONE pallas_call (VMEM-resident, bf16 MXU)
# ============================================================================
def _make_fused_kernel(n_levels, inv_ks):
    def kernel(x_ref, h1w_ref, h1b_ref, gLw_ref, gRw_ref, gb_ref,
               fw_ref, fb_ref, selEH_ref, *rest):
        out_ref = rest[-1]
        lvl = rest[:-1]                         # 4 refs per level
        f32, bf16 = jnp.float32, jnp.bfloat16

        gb = gb_ref[...]                        # f32 (1, Jp)
        gRw = gRw_ref[...]                      # bf16 (Jp, Jp) = WgR.T

        # H = relu(X @ h1.T + b_h) -- once for all nodes; bf16 MXU, f32 epilogue
        H = jnp.maximum(
            jnp.dot(x_ref[...], h1w_ref[...], preferred_element_type=f32)
            + h1b_ref[...], 0.0)
        H_b = H.astype(bf16)

        # split-g projections computed once per table
        GhL = jnp.dot(H_b, gLw_ref[...], preferred_element_type=f32)   # H @ WgL.T
        GhL_b = GhL.astype(bf16)
        # child-side projection with g1_b folded in (exact: sel_c rows are 1-hot)
        prev_Rb = (jnp.dot(H_b, gRw, preferred_element_type=f32) + gb).astype(bf16)

        # E accumulated via static 0/1 selection matmuls (no scatter)
        E = jnp.dot(selEH_ref[...], H_b, preferred_element_type=f32)

        for i in range(n_levels):
            sel_h = lvl[4 * i + 0][...]         # bf16, exact 0/1
            sel_c = lvl[4 * i + 1][...]         # bf16, exact 0/1
            seg01 = lvl[4 * i + 2][...]         # bf16, exact 0/1 (1/k applied below)
            selE = lvl[4 * i + 3][...]          # bf16, exact 0/1
            pre = (jnp.dot(sel_h, GhL_b, preferred_element_type=f32)
                   + jnp.dot(sel_c, prev_Rb, preferred_element_type=f32))
            G_b = jnp.maximum(pre, 0.0).astype(bf16)
            # segment mean: 0/1 matmul, 1/k applied as an f32 scalar (free VPU op)
            Fk = jnp.dot(seg01, G_b, preferred_element_type=f32) * inv_ks[i]
            Fk_b = Fk.astype(bf16)
            E = E + jnp.dot(selE, Fk_b, preferred_element_type=f32)
            if i + 1 < n_levels:
                prev_Rb = (jnp.dot(Fk_b, gRw, preferred_element_type=f32)
                           + gb).astype(bf16)

        # fused tail: relu(E); E2 = g(cat[H, E]); yhat = final(E2)
        E_b = jnp.maximum(E, 0.0).astype(bf16)
        E2_b = jnp.maximum(
            GhL + jnp.dot(E_b, gRw, preferred_element_type=f32) + gb, 0.0
        ).astype(bf16)
        out_ref[...] = (jnp.dot(E2_b, fw_ref[...], preferred_element_type=f32)
                        + fb_ref[...])
    return kernel


# Conservative resident budget: leaves headroom under v7x's 64 MiB physical VMEM
# and is far above v5e's 16 MiB / v6e-v7x's 32 MiB default scoped limits (which
# we raise explicitly via vmem_limit_bytes).
FUSED_VMEM_BUDGET = 48 * 1024 * 1024


def make_fused_forward(params, adjacency_list, plan):
    """Build a jitted forward that runs the whole GGCN2 in one pallas_call.

    Returns None if the dense select tables would exceed the VMEM budget; the
    caller should then use the tiled fallback path.
    """
    L = len(adjacency_list)
    J = int(params["h1_w"].shape[0])
    nfeat = int(params["h1_w"].shape[1])
    n_out = int(params["final1_w"].shape[0])

    # Keep 128-alignment (review: do NOT pad J/N to 256 while J is tiny).
    pad128 = lambda n: _round_up(max(n, 128), 128)
    Lp, Fp, Jp, Op = pad128(L), pad128(nfeat), pad128(J), pad128(n_out)

    bf16, f32 = jnp.bfloat16, jnp.float32
    g1_w = np.asarray(params["g1_w"], np.float32)

    # (array, dtype): MXU operands are bf16; biases stay f32 (epilogue adds).
    weight_consts = [
        (_pad_np(np.asarray(params["h1_w"]).T, Fp, Jp), bf16),            # h1.T
        (_pad_np(np.asarray(params["h1_b"])[None, :], 1, Jp), f32),       # h1_b
        (_pad_np(g1_w[:, :J].T, Jp, Jp), bf16),                           # WgL.T
        (_pad_np(g1_w[:, J:].T, Jp, Jp), bf16),                           # WgR.T
        (_pad_np(np.asarray(params["g1_b"])[None, :], 1, Jp), f32),       # g1_b
        (_pad_np(np.asarray(params["final1_w"]).T, Jp, Op), bf16),        # final.T
        (_pad_np(np.asarray(params["final1_b"])[None, :], 1, Op), f32),   # final_b
    ]

    # Static gather / segment matrices — exact 0/1 entries (bf16-safe).
    selE_H = np.zeros((Lp, Lp), np.float32)
    selE_lvls, level_consts, inv_ks = [], [], []
    prev_rows_p = Lp
    max_rows_p = Lp
    for lvl in plan["levels"]:
        k, S = lvl["k"], lvl["S"]
        P = S * k
        Pp, Sp = pad128(P), pad128(S)
        max_rows_p = max(max_rows_p, Pp)
        sel_h = np.zeros((Pp, Lp), np.float32)
        sel_c = np.zeros((Pp, prev_rows_p), np.float32)
        seg01 = np.zeros((Sp, Pp), np.float32)
        rows = np.arange(P)
        sel_h[rows, lvl["h_idx"]] = 1.0
        sel_c[rows, lvl["child_idx"]] = 1.0
        seg01[np.repeat(np.arange(S), k), rows] = 1.0       # exact 0/1; 1/k in-kernel
        level_consts.append((sel_h, sel_c, seg01))
        selE_lvls.append(np.zeros((Lp, Sp), np.float32))
        inv_ks.append(1.0 / k)
        prev_rows_p = Sp

    for l, nbrs in enumerate(adjacency_list):
        s = tuple(sorted(nbrs))
        d = len(s)
        if d == 0:
            continue
        if d == 1:
            selE_H[l, s[0]] = 1.0
        else:
            selE_lvls[d - 2][l, plan["levels"][d - 2]["idx_map"][s]] = 1.0

    fixed_np = list(weight_consts) + [(selE_H, bf16)]
    for (sel_h, sel_c, seg01), selE in zip(level_consts, selE_lvls):
        fixed_np += [(sel_h, bf16), (sel_c, bf16), (seg01, bf16), (selE, bf16)]
    fixed = [jnp.asarray(a, dt) for a, dt in fixed_np]

    # ---- VMEM budget (review: budget residents vs v7x 64 MiB / v5e scope) ----
    const_mode = _single_buffer_mode()
    const_mult = 1 if const_mode is not None else 2     # default specs double-buffer
    const_bytes = sum(int(np.prod(a.shape)) * a.dtype.itemsize for a in fixed)
    io_bytes = 2 * (Lp * Fp * 2 + Lp * Op * 4)          # x (bf16) + out (f32)
    inter_bytes = 8 * max_rows_p * Jp * 4               # H/GhL/prev_R/pre/Fk/E temps
    est_bytes = const_mult * const_bytes + io_bytes + inter_bytes
    if est_bytes > FUSED_VMEM_BUDGET:
        # Dense selects grow combinatorially with max degree — don't risk OOM.
        # TODO(synk): at scale, replace the dense select matmuls with
        # scalar-prefetched in-kernel row gathers (PrefetchScalarGridSpec +
        # pl.ds/jnp.take on VMEM refs) so the fused path keeps fitting 64 MiB.
        return None
    vmem_limit = int(min(FUSED_VMEM_BUDGET, max(16 * 1024 * 1024, 2 * est_bytes)))

    kernel = _make_fused_kernel(len(plan["levels"]), inv_ks)

    x_spec = pl.BlockSpec((Lp, Fp), lambda i: (0, 0))
    fixed_specs = [_const_spec(tuple(a.shape), const_mode) for a in fixed]
    out_spec = pl.BlockSpec((Lp, Op), lambda i: (0, 0))

    # TODO(synk): on v7x (2 TensorCores) add a size-2 "parallel" leading grid
    # axis splitting the tail's node rows across cores (or prefer the M-tiled
    # fallback); with grid=(1,) one core idles there.

    @jax.jit
    def forward(X):
        Xp = jnp.pad(X.astype(jnp.float32),
                     ((0, Lp - X.shape[0]), (0, Fp - X.shape[1]))).astype(bf16)
        inputs = [Xp] + fixed
        out = pl.pallas_call(
            kernel,
            out_shape=jax.ShapeDtypeStruct((Lp, Op), jnp.float32),
            grid=(1,),
            in_specs=[x_spec] + fixed_specs,
            out_specs=out_spec,
            compiler_params=pltpu.CompilerParams(
                dimension_semantics=("arbitrary",),
                vmem_limit_bytes=vmem_limit),
        )(*inputs)
        return out[:L, :n_out]

    return forward


# ============================================================================
# FALLBACK PATH: general, scalable M-tiled linear kernel + split-g glue
# ============================================================================
def _linear_kernel(x_ref, w_ref, b_ref, o_ref, *, apply_relu):
    # bf16 MXU inputs, f32 accumulation; bias/ReLU epilogue stays f32.
    acc = jnp.dot(x_ref[...], w_ref[...], preferred_element_type=jnp.float32)
    acc = acc + b_ref[...]
    if apply_relu:
        acc = jnp.maximum(acc, 0.0)
    o_ref[...] = acc


class PaddedLinear:
    """nn.Linear executed by an M-tiled Pallas kernel.

    Weights/bias are transposed + padded ONCE at construction (bf16) and stay
    VMEM-resident across the M grid (constant index_map, single-buffered where
    the Pallas build supports Buffered(1)).  x/out tiles stream; the M grid is
    'parallel' (megacore-shardable; engages both TCs on v7x for large m).
    """

    def __init__(self, w, b, compute_dtype=jnp.bfloat16, tm_cap=1024):
        w = np.asarray(w, np.float32)
        b = np.asarray(b, np.float32)
        self.n, self.k = w.shape
        self.kp = _round_up(max(self.k, 128), 128)      # keep 128-multiples; don't
        self.npad = _round_up(max(self.n, 128), 128)    # chase 256 while J is tiny
        self.tm_cap = tm_cap
        self.compute_dtype = compute_dtype
        self.wt = jnp.asarray(_pad_np(w.T, self.kp, self.npad), compute_dtype)
        self.b = jnp.asarray(_pad_np(b[None, :], 1, self.npad), jnp.float32)
        mode = _single_buffer_mode()
        self._w_spec = _const_spec((self.kp, self.npad), mode)
        self._b_spec = _const_spec((1, self.npad), mode)

    def __call__(self, x, apply_relu):
        m = x.shape[0]
        # Balanced tiles with minimal padding (no rounding m up to one big tm).
        mp8 = _round_up(max(m, 8), 8)
        n_tiles = -(-mp8 // self.tm_cap)
        tm = _round_up(-(-mp8 // n_tiles), 8)
        mp = tm * n_tiles
        xp = jnp.pad(x.astype(jnp.float32),
                     ((0, mp - m), (0, self.kp - x.shape[1])))
        xp = xp.astype(self.compute_dtype)
        out = pl.pallas_call(
            functools.partial(_linear_kernel, apply_relu=apply_relu),
            out_shape=jax.ShapeDtypeStruct((mp, self.npad), jnp.float32),
            grid=(n_tiles,),
            in_specs=[pl.BlockSpec((tm, self.kp), lambda i: (i, 0)),
                      self._w_spec, self._b_spec],
            out_specs=pl.BlockSpec((tm, self.npad), lambda i: (i, 0)),
            compiler_params=pltpu.CompilerParams(
                dimension_semantics=("parallel",),
                vmem_limit_bytes=32 * 1024 * 1024),
        )(xp, self.wt, self.b)
        return out[:m, :self.n]


def ggcn2_forward_tiled(X, lin_h1, lin_gL, lin_gRb, lin_final, plan):
    """Scalable path: split-g, contiguous reshape-reduce (no scatter),
    single flat gather for E, all matmuls in the tiled Pallas kernel."""
    H = lin_h1(X, apply_relu=True)                    # (L, J)
    GhL = lin_gL(H, apply_relu=False)                 # H @ WgL.T
    prev_Rb = lin_gRb(H, apply_relu=False)            # H @ WgR.T + g1_b
    tables = [H]
    n_levels = len(plan["levels"])
    for i, lvl in enumerate(plan["levels"]):
        k, S = lvl["k"], lvl["S"]
        # TODO(synk): fuse this per-level glue (row gathers + add/relu +
        # reshape-reduce + the following gRb matmul epilogue) into one Pallas
        # kernel with scalar-prefetched h_idx/child_idx to cut the ~4-5 HBM
        # round trips per level (largest win on v5e's low HBM BW).
        A = jnp.take(GhL, lvl["h_idx"], axis=0)
        B = jnp.take(prev_Rb, lvl["child_idx"], axis=0)
        G = jnp.maximum(A + B, 0.0)
        Fk = G.reshape(S, k, -1).sum(axis=1) * (1.0 / k)   # contiguous reduce
        tables.append(Fk)
        if i + 1 < n_levels:
            prev_Rb = lin_gRb(Fk, apply_relu=False)
    allT = jnp.concatenate(tables + [jnp.zeros((1, H.shape[1]), H.dtype)], axis=0)
    E = jnp.maximum(jnp.take(allT, plan["e_idx"], axis=0), 0.0)
    E2 = jnp.maximum(GhL + lin_gRb(E, apply_relu=False), 0.0)
    return lin_final(E2, apply_relu=False)


# ----------------------------------------------------------------------------
# Pure-numpy reference mirroring the PyTorch module exactly
# ----------------------------------------------------------------------------
def ref_forward(X, params, adjacency_list):
    h1_w, h1_b = params["h1_w"], params["h1_b"]
    g1_w, g1_b = params["g1_w"], params["g1_b"]
    f1_w, f1_b = params["final1_w"], params["final1_b"]
    relu = lambda v: np.maximum(v, 0.0)
    h = lambda v: relu(v @ h1_w.T + h1_b)
    g = lambda v: relu(v @ g1_w.T + g1_b)
    final = lambda v: v @ f1_w.T + f1_b
    J = h1_w.shape[0]

    def fk(idx, k):
        if k == 1:
            return h(X[list(idx)])
        result = np.zeros((1, J), np.float32)
        for i in range(len(idx)):
            idx_temp = list(idx)
            idx1 = idx_temp[i]
            idx_temp.remove(idx1)
            X2 = fk(idx_temp, k - 1)
            hv = h(X[idx1])
            cat = np.concatenate([hv, X2[0]])
            result = result + g(cat) / len(idx)
        return result

    E = np.zeros((0, J), np.float32)
    for l in range(len(adjacency_list)):
        E = np.concatenate(
            [E, fk(adjacency_list[l], len(adjacency_list[l]))], axis=0)
    E = relu(E)
    temp = np.concatenate([h(X), E], axis=1)
    E = g(temp)
    return final(E)


# ----------------------------------------------------------------------------
# Deterministic PyTorch-style Linear init
# ----------------------------------------------------------------------------
def init_linear(key, out_features, in_features):
    k1, k2 = jax.random.split(key)
    bound = 1.0 / np.sqrt(in_features)
    w = jax.random.uniform(k1, (out_features, in_features), jnp.float32, -bound, bound)
    b = jax.random.uniform(k2, (out_features,), jnp.float32, -bound, bound)
    return w, b


if __name__ == "__main__":
    nfeat, J, L = 4, 16, 8
    adjacency_list = [
        [1, 7], [0, 2], [1, 3, 4], [2, 4],
        [2, 3, 5], [4, 6, 7], [5, 7], [5, 6, 0],
    ]

    key = jax.random.PRNGKey(0)
    k_x, k_h1, k_h2, k_g1, k_f1 = jax.random.split(key, 5)
    X = jax.random.normal(k_x, (L, nfeat), jnp.float32)

    h1_w, h1_b = init_linear(k_h1, J, nfeat)
    h2_w, h2_b = init_linear(k_h2, J, J)       # declared in __init__, unused in forward
    g1_w, g1_b = init_linear(k_g1, J, 2 * J)
    f1_w, f1_b = init_linear(k_f1, 2, J)       # binary=True -> Linear(J, 2)

    params = dict(h1_w=h1_w, h1_b=h1_b, g1_w=g1_w, g1_b=g1_b,
                  final1_w=f1_w, final1_b=f1_b)

    plan = build_plan(adjacency_list)

    # ---- scalable fallback: M-tiled weight-resident kernels -------------------
    g1_w_np = np.asarray(g1_w)
    lin_h1 = PaddedLinear(h1_w, h1_b)
    lin_gL = PaddedLinear(g1_w_np[:, :J], np.zeros((J,), np.float32))
    lin_gRb = PaddedLinear(g1_w_np[:, J:], g1_b)
    lin_final = PaddedLinear(f1_w, f1_b)
    tiled_forward = jax.jit(
        lambda x: ggcn2_forward_tiled(x, lin_h1, lin_gL, lin_gRb, lin_final, plan))
    y_tiled = jax.block_until_ready(tiled_forward(X))

    # ---- primary: whole forward fused into one pallas_call --------------------
    fused_forward = make_fused_forward(params, adjacency_list, plan)
    y_fused = None
    if fused_forward is not None:        # None => dense selects over VMEM budget
        y_fused = jax.block_until_ready(fused_forward(X))

    # ---- verify against the exact numpy reference of the PyTorch module -------
    ref = ref_forward(np.asarray(X),
                      {k: np.asarray(v) for k, v in params.items()},
                      adjacency_list)

    assert y_tiled.shape == (L, 2), y_tiled.shape
    err_t = float(np.max(np.abs(np.asarray(y_tiled) - ref)))
    assert np.allclose(np.asarray(y_tiled), ref, rtol=5e-2, atol=5e-2), \
        f"tiled max abs err {err_t}"

    if y_fused is not None:
        assert y_fused.shape == (L, 2), y_fused.shape
        err_f = float(np.max(np.abs(np.asarray(y_fused) - ref)))
        assert np.allclose(np.asarray(y_fused), ref, rtol=5e-2, atol=5e-2), \
            f"fused max abs err {err_f}"

    print("KERNEL_OK")
</pallas_src>

<mosaic_0001>
module attributes {stable_mosaic.version = 11 : i64} {
  func.func @_k(%arg0: i32, %arg1: memref<8x128xf32, #tpu.memory_space<vmem>>, %arg2: memref<8x128xf32, #tpu.memory_space<vmem>>, %arg3: memref<8x128xf32, #tpu.memory_space<vmem>>) attributes {dimension_semantics = [#tpu.dimension_semantics<arbitrary>], iteration_bounds = array<i64: 2>, scalar_prefetch = 0 : i64, scratch_operands = 0 : i64, tpu.core_type = #tpu.core_type<tc>, window_params = [{transform_indices = @transform_0, window_bounds = array<i64: 8, 128>}, {pipeline_mode = #tpu.pipeline_mode<synchronous>, transform_indices = @transform_1, window_bounds = array<i64: 8, 128>}, {transform_indices = @transform_2, window_bounds = array<i64: 8, 128>}]} {
    %c0 = arith.constant 0 : index
    %c0_0 = arith.constant 0 : index
    %0 = vector.load %arg1[%c0, %c0_0] : memref<8x128xf32, #tpu.memory_space<vmem>>, vector<8x128xf32>
    %c0_1 = arith.constant 0 : index
    %c0_2 = arith.constant 0 : index
    %1 = vector.load %arg2[%c0_1, %c0_2] : memref<8x128xf32, #tpu.memory_space<vmem>>, vector<8x128xf32>
    %2 = arith.addf %0, %1 : vector<8x128xf32>
    %c0_3 = arith.constant 0 : index
    %c0_4 = arith.constant 0 : index
    %3 = vector.load %arg3[%c0_3, %c0_4] : memref<8x128xf32, #tpu.memory_space<vmem>>, vector<8x128xf32>
    tpu.vector_store %arg3[%c0_3, %c0_4], %2 {strides = array<i32>} : memref<8x128xf32, #tpu.memory_space<vmem>>, vector<8x128xf32>,
    return
  }
  func.func @transform_0(%arg0: i32) -> (i32, i32) {
    %c0_i32 = arith.constant 0 : i32
    %c0_i32_0 = arith.constant 0 : i32
    return %arg0, %c0_i32 : i32, i32
  }
  func.func @transform_1(%arg0: i32) -> (i32, i32) {
    %c0_i32 = arith.constant 0 : i32
    %c0_i32_0 = arith.constant 0 : i32
    %c0_i32_1 = arith.constant 0 : i32
    return %c0_i32, %c0_i32_0 : i32, i32
  }
  func.func @transform_2(%arg0: i32) -> (i32, i32) {
    %c0_i32 = arith.constant 0 : i32
    %c0_i32_0 = arith.constant 0 : i32
    return %arg0, %c0_i32 : i32, i32
  }
}

module attributes {stable_mosaic.version = 11 : i64} {
  func.func @_linear_kernel(%arg0: i32, %arg1: memref<8x128xbf16, #tpu.memory_space<vmem>>, %arg2: memref<128x128xbf16, #tpu.memory_space<vmem>>, %arg3: memref<1x128xf32, #tpu.memory_space<vmem>>, %arg4: memref<8x128xf32, #tpu.memory_space<vmem>>) attributes {dimension_semantics = [#tpu.dimension_semantics<parallel>], iteration_bounds = array<i64: 1>, scalar_prefetch = 0 : i64, scratch_operands = 0 : i64, tpu.core_type = #tpu.core_type<tc>, window_params = [{transform_indices = @transform_0, window_bounds = array<i64: 8, 128>}, {pipeline_mode = #tpu.pipeline_mode<synchronous>, transform_indices = @transform_1, window_bounds = array<i64: 128, 128>}, {pipeline_mode = #tpu.pipeline_mode<synchronous>, transform_indices = @transform_2, window_bounds = array<i64: 1, 128>}, {transform_indices = @transform_3, window_bounds = array<i64: 8, 128>}]} {
    %c0 = arith.constant 0 : index
    %c0_0 = arith.constant 0 : index
    %0 = vector.load %arg1[%c0, %c0_0] : memref<8x128xbf16, #tpu.memory_space<vmem>>, vector<8x128xbf16>
    %c0_1 = arith.constant 0 : index
    %c0_2 = arith.constant 0 : index
    %1 = vector.load %arg2[%c0_1, %c0_2] : memref<128x128xbf16, #tpu.memory_space<vmem>>, vector<128x128xbf16>
    %cst = arith.constant dense<0.000000e+00> : vector<8x128xf32>
    %2 = tpu.matmul %0, %1, %cst {dimension_numbers = #tpu.dot_dimension_numbers<[1], [0], [0], [1], [0, 0, 1, 1], [], []>} : vector<8x128xbf16>, vector<128x128xbf16>, vector<8x128xf32> -> vector<8x128xf32>
    %c0_3 = arith.constant 0 : index
    %c0_4 = arith.constant 0 : index
    %3 = vector.load %arg3[%c0_3, %c0_4] : memref<1x128xf32, #tpu.memory_space<vmem>>, vector<1x128xf32>
    %4 = vector.broadcast %3 : vector<1x128xf32> to vector<8x128xf32>
    %5 = arith.addf %2, %4 : vector<8x128xf32>
    %cst_5 = arith.constant 0.000000e+00 : f32
    %6 = vector.broadcast %cst_5 : f32 to vector<8x128xf32>
    %7 = arith.maximumf %5, %6 : vector<8x128xf32>
    %c0_6 = arith.constant 0 : index
    %c0_7 = arith.constant 0 : index
    %8 = vector.load %arg4[%c0_6, %c0_7] : memref<8x128xf32, #tpu.memory_space<vmem>>, vector<8x128xf32>
    tpu.vector_store %arg4[%c0_6, %c0_7], %7 {strides = array<i32>} : memref<8x128xf32, #tpu.memory_space<vmem>>, vector<8x128xf32>,
    return
  }
  func.func @transform_0(%arg0: i32) -> (i32, i32) {
    %c0_i32 = arith.constant 0 : i32
    %c0_i32_0 = arith.constant 0 : i32
    return %arg0, %c0_i32 : i32, i32
  }
  func.func @transform_1(%arg0: i32) -> (i32, i32) {
    %c0_i32 = arith.constant 0 : i32
    %c0_i32_0 = arith.constant 0 : i32
    %c0_i32_1 = arith.constant 0 : i32
    return %c0_i32, %c0_i32_0 : i32, i32
  }
  func.func @transform_2(%arg0: i32) -> (i32, i32) {
    %c0_i32 = arith.constant 0 : i32
    %c0_i32_0 = arith.constant 0 : i32
    %c0_i32_1 = arith.constant 0 : i32
    return %c0_i32, %c0_i32_0 : i32, i32
  }
  func.func @transform_3(%arg0: i32) -> (i32, i32) {
    %c0_i32 = arith.constant 0 : i32
    %c0_i32_0 = arith.constant 0 : i32
    return %arg0, %c0_i32 : i32, i32
  }
}

module attributes {stable_mosaic.version = 11 : i64} {
  func.func @_linear_kernel(%arg0: i32, %arg1: memref<8x128xbf16, #tpu.memory_space<vmem>>, %arg2: memref<128x128xbf16, #tpu.memory_space<vmem>>, %arg3: memref<1x128xf32, #tpu.memory_space<vmem>>, %arg4: memref<8x128xf32, #tpu.memory_space<vmem>>) attributes {dimension_semantics = [#tpu.dimension_semantics<parallel>], iteration_bounds = array<i64: 1>, scalar_prefetch = 0 : i64, scratch_operands = 0 : i64, tpu.core_type = #tpu.core_type<tc>, window_params = [{transform_indices = @transform_0, window_bounds = array<i64: 8, 128>}, {pipeline_mode = #tpu.pipeline_mode<synchronous>, transform_indices = @transform_1, window_bounds = array<i64: 128, 128>}, {pipeline_mode = #tpu.pipeline_mode<synchronous>, transform_indices = @transform_2, window_bounds = array<i64: 1, 128>}, {transform_indices = @transform_3, window_bounds = array<i64: 8, 128>}]} {
    %c0 = arith.constant 0 : index
    %c0_0 = arith.constant 0 : index
    %0 = vector.load %arg1[%c0, %c0_0] : memref<8x128xbf16, #tpu.memory_space<vmem>>, vector<8x128xbf16>
    %c0_1 = arith.constant 0 : index
    %c0_2 = arith.constant 0 : index
    %1 = vector.load %arg2[%c0_1, %c0_2] : memref<128x128xbf16, #tpu.memory_space<vmem>>, vector<128x128xbf16>
    %cst = arith.constant dense<0.000000e+00> : vector<8x128xf32>
    %2 = tpu.matmul %0, %1, %cst {dimension_numbers = #tpu.dot_dimension_numbers<[1], [0], [0], [1], [0, 0, 1, 1], [], []>} : vector<8x128xbf16>, vector<128x128xbf16>, vector<8x128xf32> -> vector<8x128xf32>
    %c0_3 = arith.constant 0 : index
    %c0_4 = arith.constant 0 : index
    %3 = vector.load %arg3[%c0_3, %c0_4] : memref<1x128xf32, #tpu.memory_space<vmem>>, vector<1x128xf32>
    %4 = vector.broadcast %3 : vector<1x128xf32> to vector<8x128xf32>
    %5 = arith.addf %2, %4 : vector<8x128xf32>
    %c0_5 = arith.constant 0 : index
    %c0_6 = arith.constant 0 : index
    %6 = vector.load %arg4[%c0_5, %c0_6] : memref<8x128xf32, #tpu.memory_space<vmem>>, vector<8x128xf32>
    tpu.vector_store %arg4[%c0_5, %c0_6], %5 {strides = array<i32>} : memref<8x128xf32, #tpu.memory_space<vmem>>, vector<8x128xf32>,
    return
  }
  func.func @transform_0(%arg0: i32) -> (i32, i32) {
    %c0_i32 = arith.constant 0 : i32
    %c0_i32_0 = arith.constant 0 : i32
    return %arg0, %c0_i32 : i32, i32
  }
  func.func @transform_1(%arg0: i32) -> (i32, i32) {
    %c0_i32 = arith.constant 0 : i32
    %c0_i32_0 = arith.constant 0 : i32
    %c0_i32_1 = arith.constant 0 : i32
    return %c0_i32, %c0_i32_0 : i32, i32
  }
  func.func @transform_2(%arg0: i32) -> (i32, i32) {
    %c0_i32 = arith.constant 0 : i32
    %c0_i32_0 = arith.constant 0 : i32
    %c0_i32_1 = arith.constant 0 : i32
    return %c0_i32, %c0_i32_0 : i32, i32
  }
  func.func @transform_3(%arg0: i32) -> (i32, i32) {
    %c0_i32 = arith.constant 0 : i32
    %c0_i32_0 = arith.constant 0 : i32
    return %arg0, %c0_i32 : i32, i32
  }
}

module attributes {stable_mosaic.version = 11 : i64} {
  func.func @_linear_kernel(%arg0: i32, %arg1: memref<16x128xbf16, #tpu.memory_space<vmem>>, %arg2: memref<128x128xbf16, #tpu.memory_space<vmem>>, %arg3: memref<1x128xf32, #tpu.memory_space<vmem>>, %arg4: memref<16x128xf32, #tpu.memory_space<vmem>>) attributes {dimension_semantics = [#tpu.dimension_semantics<parallel>], iteration_bounds = array<i64: 1>, scalar_prefetch = 0 : i64, scratch_operands = 0 : i64, tpu.core_type = #tpu.core_type<tc>, window_params = [{transform_indices = @transform_0, window_bounds = array<i64: 16, 128>}, {pipeline_mode = #tpu.pipeline_mode<synchronous>, transform_indices = @transform_1, window_bounds = array<i64: 128, 128>}, {pipeline_mode = #tpu.pipeline_mode<synchronous>, transform_indices = @transform_2, window_bounds = array<i64: 1, 128>}, {transform_indices = @transform_3, window_bounds = array<i64: 16, 128>}]} {
    %c0 = arith.constant 0 : index
    %c0_0 = arith.constant 0 : index
    %0 = vector.load %arg1[%c0, %c0_0] : memref<16x128xbf16, #tpu.memory_space<vmem>>, vector<16x128xbf16>
    %c0_1 = arith.constant 0 : index
    %c0_2 = arith.constant 0 : index
    %1 = vector.load %arg2[%c0_1, %c0_2] : memref<128x128xbf16, #tpu.memory_space<vmem>>, vector<128x128xbf16>
    %cst = arith.constant dense<0.000000e+00> : vector<16x128xf32>
    %2 = tpu.matmul %0, %1, %cst {dimension_numbers = #tpu.dot_dimension_numbers<[1], [0], [0], [1], [0, 0, 1, 1], [], []>} : vector<16x128xbf16>, vector<128x128xbf16>, vector<16x128xf32> -> vector<16x128xf32>
    %c0_3 = arith.constant 0 : index
    %c0_4 = arith.constant 0 : index
    %3 = vector.load %arg3[%c0_3, %c0_4] : memref<1x128xf32, #tpu.memory_space<vmem>>, vector<1x128xf32>
    %4 = vector.broadcast %3 : vector<1x128xf32> to vector<16x128xf32>
    %5 = arith.addf %2, %4 : vector<16x128xf32>
    %c0_5 = arith.constant 0 : index
    %c0_6 = arith.constant 0 : index
    %6 = vector.load %arg4[%c0_5, %c0_6] : memref<16x128xf32, #tpu.memory_space<vmem>>, vector<16x128xf32>
    tpu.vector_store %arg4[%c0_5, %c0_6], %5 {strides = array<i32>} : memref<16x128xf32, #tpu.memory_space<vmem>>, vector<16x128xf32>,
    return
  }
  func.func @transform_0(%arg0: i32) -> (i32, i32) {
    %c0_i32 = arith.constant 0 : i32
    %c0_i32_0 = arith.constant 0 : i32
    return %arg0, %c0_i32 : i32, i32
  }
  func.func @transform_1(%arg0: i32) -> (i32, i32) {
    %c0_i32 = arith.constant 0 : i32
    %c0_i32_0 = arith.constant 0 : i32
    %c0_i32_1 = arith.constant 0 : i32
    return %c0_i32, %c0_i32_0 : i32, i32
  }
  func.func @transform_2(%arg0: i32) -> (i32, i32) {
    %c0_i32 = arith.constant 0 : i32
    %c0_i32_0 = arith.constant 0 : i32
    %c0_i32_1 = arith.constant 0 : i32
    return %c0_i32, %c0_i32_0 : i32, i32
  }
  func.func @transform_3(%arg0: i32) -> (i32, i32) {
    %c0_i32 = arith.constant 0 : i32
    %c0_i32_0 = arith.constant 0 : i32
    return %arg0, %c0_i32 : i32, i32
  }
}

</mosaic_0001>

<llo_original>
// kernel: tpu_custom_call.1
$region0: #{tpu_custom_call.1}
  #allocation0 [shape = 'u32[]', space=smem, size = 0x4, offset = 0x4, fixed_abs, tag = 'smem constant byte address 0x4 - core index']
  #allocation1 [shape = 'u32[144,128]{1,0:T(1,128)}', space=vmem, size = 0x12000, scoped, tag = 'internal scratch']
  %s0 = inlined_call_operand.hbm [shape: f32[16,128], index: 0, kind: input, shape index: {}]
  %s1 = inlined_call_operand.hbm [shape: f32[8,128], index: 1, kind: input, shape index: {}]
  %s2 = inlined_call_operand.hbm [shape: f32[16,128], index: 2, kind: output, shape index: {}]
  %s3 = sld [smem:[#allocation0]]
  $region49: #{tpu_custom_call.1} parent=0
    _
  %s5 = ssub.s32 1, %s3
  %s6 = scalar_select 0, %s5, %s3
  $region1: #{tpu_custom_call.1} parent=0
    #allocation2 [shape = 'u8[8192]{0}', space=vmem, size = 0x2000, scoped, tag = 'input window, operand 0']
    #allocation3 [shape = 's32[2]{0}', space=sflag, size = 0x8, scoped, tag = 'scoped memory for tpu_custom_call.1']
    #allocation4 [shape = 's32[2]{0}', space=sflag, size = 0x8, scoped, tag = 'scoped memory for tpu_custom_call.1']
    #allocation5 [shape = 'u8[4096]{0}', space=vmem, size = 0x1000, scoped, tag = 'input window, operand 1, single buffered']
    #allocation6 [shape = 's32[1]{0}', space=sflag, size = 0x4, scoped, tag = 'scoped memory for tpu_custom_call.1']
    #allocation7 [shape = 'u8[8192]{0}', space=vmem, size = 0x2000, scoped, tag = 'output window, operand 0']
    %7 = vsyncpa [#allocation3], 0
    %s8 = scalar_lea.sflag [#allocation3], 1
    %9 = vsyncpa %s8, 0
    %10 = vsyncpa [#allocation6], 0
    %11 = vsyncpa [#allocation4], 0
    %s12 = scalar_lea.sflag [#allocation4], 1
    %13 = vsyncpa %s12, 0
    loop: start=0, step=1, limit=4
    $region2: #{tpu_custom_call.1} parent=1 // loop_pre_header
      _
    $region3: #{tpu_custom_call.1} parent=1 // loop_header
      %s15 = sphi 0, %s19
      %p16 = scmp.ge.s32.totalorder %s15, 4
      %s25 = sphi 0, %s27
      %s28 = sphi 0, %s25
      %s29 = sphi 0, %s28
      %s45 = sphi 0, %s29
      %s49 = sphi 0, %s49
      %s51 = sphi 0, %s49
      %s52 = sphi 0, %s51
      %s66 = sphi 0, %s52
      %s72 = sphi 0, %s74
      %s75 = sphi 0, %s72
      %s76 = sphi 0, %s75
      %s92 = sphi 0, %s76
    $region4: #{tpu_custom_call.1} parent=1 // loop_header_branch
      %18 = sbr.rel (%p16) target = $region8
    $region5: #{tpu_custom_call.1} parent=1 // loop_body
      %s20 = ssub.s32 %s15, 1
      %s21 = ssub.s32 %s15, 2
      %s22 = sadd.s32 %s15, 1
      %s23 = ssub.s32 %s15, %s22
      %p24 = scmp.eq.s32.totalorder %s23, 0
      %s26 = sadd.s32 %s25, 1
      %s27 = scalar_select %p24, %s25, %s26
      %p30 = pneg %p24
      %p31 = scmp.eq.s32.totalorder %s15, 1
      %p32 = por %p30, %p31
      %p33 = scmp.ne.s32.totalorder %s25, %s28
      %p34 = scmp.eq.s32.totalorder %s15, 0
      %p35 = por %p33, %p34
      %p36 = scmp.ne.s32.totalorder %s25, %s28
      %p37 = scmp.eq.s32.totalorder %s20, 1
      %p38 = por %p36, %p37
      %p39 = scmp.ne.s32.totalorder %s28, %s29
      %p40 = scmp.eq.s32.totalorder %s20, 0
      %p41 = por %p39, %p40
      %p42 = scmp.ne.s32.totalorder %s28, %s29
      %p43 = scmp.eq.s32.totalorder %s21, 1
      %p44 = por %p42, %p43
      %p46 = scmp.ne.s32.totalorder %s29, %s45
      %p47 = scmp.eq.s32.totalorder %s21, 0
      %p48 = por %p46, %p47
      %s50 = sadd.s32 %s49, 1
      %p53 = scmp.eq.s32.totalorder %s15, 1
      %p54 = scmp.ne.s32.totalorder %s49, %s51
      %p55 = scmp.eq.s32.totalorder %s15, 0
      %p56 = por %p54, %p55
      %p57 = scmp.ne.s32.totalorder %s49, %s51
      %p58 = scmp.eq.s32.totalorder %s20, 1
      %p59 = por %p57, %p58
      %p60 = scmp.ne.s32.totalorder %s51, %s52
      %p61 = scmp.eq.s32.totalorder %s20, 0
      %p62 = por %p60, %p61
      %p63 = scmp.ne.s32.totalorder %s51, %s52
      %p64 = scmp.eq.s32.totalorder %s21, 1
      %p65 = por %p63, %p64
      %p67 = scmp.ne.s32.totalorder %s52, %s66
      %p68 = scmp.eq.s32.totalorder %s21, 0
      %p69 = por %p67, %p68
      %s70 = ssub.s32 %s15, %s22
      %p71 = scmp.eq.s32.totalorder %s70, 0
      %s73 = sadd.s32 %s72, 1
      %s74 = scalar_select %p71, %s72, %s73
      %p77 = pneg %p71
      %p78 = scmp.eq.s32.totalorder %s15, 1
      %p79 = por %p77, %p78
      %p80 = scmp.ne.s32.totalorder %s72, %s75
      %p81 = scmp.eq.s32.totalorder %s15, 0
      %p82 = por %p80, %p81
      %p83 = scmp.ne.s32.totalorder %s72, %s75
      %p84 = scmp.eq.s32.totalorder %s20, 1
      %p85 = por %p83, %p84
      %p86 = scmp.ne.s32.totalorder %s75, %s76
      %p87 = scmp.eq.s32.totalorder %s20, 0
      %p88 = por %p86, %p87
      %p89 = scmp.ne.s32.totalorder %s75, %s76
      %p90 = scmp.eq.s32.totalorder %s21, 1
      %p91 = por %p89, %p90
      %p93 = scmp.ne.s32.totalorder %s76, %s92
      %p94 = scmp.eq.s32.totalorder %s21, 0
      %p95 = por %p93, %p94
      %p96 = scmp.le.s32.totalorder 1, %s15
      %p97 = scmp.lt.s32.totalorder %s15, 3
      %p98 = pnand %p96, %p97
      %p99 = pneg %p98
      // Predicated region
      $region9: #{tpu_custom_call.1} parent=5 // pred_check
        _
      $region10: #{tpu_custom_call.1} parent=5 // pred_check_branch
        %101 = sbr.rel (%p98) target = $region12
      $region11: #{tpu_custom_call.1} parent=5 // pred_region
        %s102 = ssub.s32 %s15, 1
        // Predicated region
        $region13: #{tpu_custom_call.1} parent=11 // pred_check
          %p103 = pneg %p62
        $region14: #{tpu_custom_call.1} parent=11 // pred_check_branch
          %105 = sbr.rel (%p103) target = $region16
        $region15: #{tpu_custom_call.1} parent=11 // pred_region
          %s107 = ssub.s32 128, 128
          %108 = vsyncadd [#allocation6], %s107
          %s110 = sshll.u32 [#allocation5], 4
          %s111 = int_to_ptr.vmem [resolvable:$true] %s110
          %113 = dma.hbm_to_vmem [thread:$0]  %s1, 128, %s111, [#allocation6]
        $region16: #{tpu_custom_call.1} parent=11 // pred_fallthru
          _
      $region12: #{tpu_custom_call.1} parent=5 // pred_fallthru
        _
      %p114 = scmp.lt.s32.totalorder %s15, 2
      // Predicated region
      $region17: #{tpu_custom_call.1} parent=5 // pred_check
        %p115 = pneg %p114
      $region18: #{tpu_custom_call.1} parent=5 // pred_check_branch
        %117 = sbr.rel (%p115) target = $region20
      $region19: #{tpu_custom_call.1} parent=5 // pred_region
        // Predicated region
        $region21: #{tpu_custom_call.1} parent=19 // pred_check
          %p118 = pneg %p35
        $region22: #{tpu_custom_call.1} parent=19 // pred_check_branch
          %120 = sbr.rel (%p118) target = $region24
        $region23: #{tpu_custom_call.1} parent=19 // pred_region
          %s121 = sand.u32 %s25, 1
          %s122 = scalar_lea.sflag [#allocation3], %s121
          %s123 = sand.u32 %s25, 1
          %s124 = smul.addr %s123, 8
          %s125 = scalar_lea.vmem [#allocation2], %s124
          %s127 = ssub.s32 128, 128
          %128 = vsyncadd %s122, %s127
          %s129 = smul.addr %s15, 128
          %s130 = scalar_lea.hbm %s0, %s129
          %s132 = sshll.u32 %s125, 4
          %s133 = int_to_ptr.vmem [resolvable:$true] %s132
          %135 = dma.hbm_to_vmem [thread:$0]  %s130, 128, %s133, %s122
        $region24: #{tpu_custom_call.1} parent=19 // pred_fallthru
          _
      $region20: #{tpu_custom_call.1} parent=5 // pred_fallthru
        _
      %p136 = scmp.le.s32.totalorder 1, %s15
      %p137 = scmp.lt.s32.totalorder %s15, 3
      %p138 = pnand %p136, %p137
      %p139 = pneg %p138
      // Predicated region
      $region25: #{tpu_custom_call.1} parent=5 // pred_check
        _
      $region26: #{tpu_custom_call.1} parent=5 // pred_check_branch
        %141 = sbr.rel (%p138) target = $region28
      $region27: #{tpu_custom_call.1} parent=5 // pred_region
        %s142 = ssub.s32 %s15, 1
        %s143 = sand.u32 %s28, 1
        %s144 = scalar_lea.sflag [#allocation3], %s143
        %s145 = sand.u32 %s28, 1
        %s146 = smul.addr %s145, 8
        %s147 = scalar_lea.vmem [#allocation2], %s146
        // Predicated region
        $region29: #{tpu_custom_call.1} parent=27 // pred_check
          %p148 = pneg %p41
        $region30: #{tpu_custom_call.1} parent=27 // pred_check_branch
          %150 = sbr.rel (%p148) target = $region32
        $region31: #{tpu_custom_call.1} parent=27 // pred_region
          %151 = dma.done %s144, 128
        $region32: #{tpu_custom_call.1} parent=27 // pred_fallthru
          _
        // Predicated region
        $region33: #{tpu_custom_call.1} parent=27 // pred_check
          %p152 = pneg %p62
        $region34: #{tpu_custom_call.1} parent=27 // pred_check_branch
          %154 = sbr.rel (%p152) target = $region36
        $region35: #{tpu_custom_call.1} parent=27 // pred_region
          %155 = dma.done [#allocation6], 128
        $region36: #{tpu_custom_call.1} parent=27 // pred_fallthru
          _
        %s156 = sand.u32 %s28, 1
        %s157 = scalar_lea.sflag [#allocation3], %s156
        %s158 = sand.u32 %s28, 1
        %s159 = smul.addr %s158, 8
        %s160 = scalar_lea.vmem [#allocation2], %s159
        %p161 = pneg %p41
        %p162 = pneg %p38
        %p163 = pneg %p62
        %p164 = pneg %p59
        %p165 = pneg %p88
        %p166 = pneg %p85
        %s167 = sand.u32 %s75, 1
        %s168 = scalar_lea.sflag [#allocation4], %s167
        %s169 = sand.u32 %s75, 1
        %s170 = smul.addr %s169, 8
        %s171 = scalar_lea.vmem [#allocation7], %s170
        %v172 = vld [vmem:[%s147] sm:$0xff]
        %v173 = vld [vmem:[#allocation5] sm:$0xff]
        %v174 = vadd.f32 %v172, %v173
        %175 = vst [vmem:[%s171] sm:$0xff] %v174
        %s176 = sand.u32 %s75, 1
        %s177 = scalar_lea.sflag [#allocation4], %s176
        %s178 = sand.u32 %s75, 1
        %s179 = smul.addr %s178, 8
        %s180 = scalar_lea.vmem [#allocation7], %s179
        // Predicated region
        $region37: #{tpu_custom_call.1} parent=27 // pred_check
          %p181 = pneg %p85
        $region38: #{tpu_custom_call.1} parent=27 // pred_check_branch
          %183 = sbr.rel (%p181) target = $region40
        $region39: #{tpu_custom_call.1} parent=27 // pred_region
          %s185 = ssub.s32 128, 128
          %186 = vsyncadd %s177, %s185
          %s187 = smul.addr %s20, 128
          %s188 = scalar_lea.hbm %s2, %s187
          %s190 = sshll.u32 %s180, 4
          %s191 = int_to_ptr.vmem [resolvable:$true] %s190
          %193 = dma.vmem_to_hbm [thread:$0]  %s191, 128, %s188, %s177
        $region40: #{tpu_custom_call.1} parent=27 // pred_fallthru
          _
      $region28: #{tpu_custom_call.1} parent=5 // pred_fallthru
        _
      %p194 = scmp.le.s32.totalorder 2, %s15
      // Predicated region
      $region41: #{tpu_custom_call.1} parent=5 // pred_check
        %p195 = pneg %p194
      $region42: #{tpu_custom_call.1} parent=5 // pred_check_branch
        %197 = sbr.rel (%p195) target = $region44
      $region43: #{tpu_custom_call.1} parent=5 // pred_region
        %s198 = ssub.s32 %s15, 2
        // Predicated region
        $region45: #{tpu_custom_call.1} parent=43 // pred_check
          %p199 = pneg %p91
        $region46: #{tpu_custom_call.1} parent=43 // pred_check_branch
          %201 = sbr.rel (%p199) target = $region48
        $region47: #{tpu_custom_call.1} parent=43 // pred_region
          %s202 = sand.u32 %s76, 1
          %s203 = scalar_lea.sflag [#allocation4], %s202
          %s204 = sand.u32 %s76, 1
          %s205 = smul.addr %s204, 8
          %s206 = scalar_lea.vmem [#allocation7], %s205
          %207 = dma.done %s203, 128
        $region48: #{tpu_custom_call.1} parent=43 // pred_fallthru
          _
      $region44: #{tpu_custom_call.1} parent=5 // pred_fallthru
        _
    $region6: #{tpu_custom_call.1} parent=1 // loop_footer
      %s19 = sadd.s32 1, %s15
    $region7: #{tpu_custom_call.1} parent=1 // loop_footer_branch
      %14 = sbr.rel target = $region3
    $region8: #{tpu_custom_call.1} parent=1 // loop_exit
      _
    %208 = vsyncpa [#allocation3], 1
    %s209 = scalar_lea.sflag [#allocation3], 1
    %210 = vsyncpa %s209, 1
    %211 = vsyncpa [#allocation6], 1
    %212 = vsyncpa [#allocation4], 1
    %s213 = scalar_lea.sflag [#allocation4], 1
    %214 = vsyncpa %s213, 1

// kernel: _lambda_.6
$region0: #{_lambda_.6}
  #allocation0 [shape = 'u32[]', space=smem, size = 0x4, offset = 0x4, fixed_abs, tag = 'smem constant byte address 0x4 - core index']
  #allocation1 [shape = 'u32[144,128]{1,0:T(1,128)}', space=vmem, size = 0x12000, scoped, tag = 'internal scratch']
  %s0 = inlined_call_operand.vmem [shape: bf16[8,128], index: 0, kind: input, shape index: {}]
  %s1 = inlined_call_operand.vmem [shape: bf16[128,128], index: 1, kind: input, shape index: {}]
  %s2 = inlined_call_operand.vmem [shape: f32[1,128], index: 2, kind: input, shape index: {}]
  %s3 = inlined_call_operand.vmem [shape: f32[8,128], index: 3, kind: output, shape index: {}]
  %s4 = sld [smem:[#allocation0]]
  $region22: #{_lambda_.6} parent=0
    _
  %s6 = ssub.s32 1, %s4
  %s7 = scalar_select 0, %s6, %s4
  // Predicated region
  $region2: #{_lambda_.6} parent=0 // pred_check
    _
  $region3: #{_lambda_.6} parent=0 // pred_check_branch
    %9 = sbr.rel (0) target = $region5
  $region4: #{_lambda_.6} parent=0 // pred_region
    _
  $region5: #{_lambda_.6} parent=0 // pred_fallthru
    _
  // Predicated region
  $region6: #{_lambda_.6} parent=0 // pred_check
    _
  $region7: #{_lambda_.6} parent=0 // pred_check_branch
    %11 = sbr.rel (0) target = $region9
  $region8: #{_lambda_.6} parent=0 // pred_region
    _
  $region9: #{_lambda_.6} parent=0 // pred_fallthru
    _
  // Predicated region
  $region10: #{_lambda_.6} parent=0 // pred_check
    _
  $region11: #{_lambda_.6} parent=0 // pred_check_branch
    %13 = sbr.rel (0) target = $region13
  $region12: #{_lambda_.6} parent=0 // pred_region
    _
  $region13: #{_lambda_.6} parent=0 // pred_fallthru
    _
  %v15 = vld [vmem:[%s0] sm:$0xf]
  %v16 = vld [vmem:[%s1] sm:$0xf]
  %v17 = vld [vmem:[%s1 + $0x4] sm:$0xf]
  %v18 = vld [vmem:[%s1 + $0x8] sm:$0xf]
  %v19 = vld [vmem:[%s1 + $0xc] sm:$0xf]
  %v20 = vld [vmem:[%s1 + $0x10] sm:$0xf]
  %v21 = vld [vmem:[%s1 + $0x14] sm:$0xf]
  %v22 = vld [vmem:[%s1 + $0x18] sm:$0xf]
  %v23 = vld [vmem:[%s1 + $0x1c] sm:$0xf]
  %v24 = vld [vmem:[%s1 + $0x20] sm:$0xf]
  %v25 = vld [vmem:[%s1 + $0x24] sm:$0xf]
  %v26 = vld [vmem:[%s1 + $0x28] sm:$0xf]
  %v27 = vld [vmem:[%s1 + $0x2c] sm:$0xf]
  %v28 = vld [vmem:[%s1 + $0x30] sm:$0xf]
  %v29 = vld [vmem:[%s1 + $0x34] sm:$0xf]
  %v30 = vld [vmem:[%s1 + $0x38] sm:$0xf]
  %v31 = vld [vmem:[%s1 + $0x3c] sm:$0xf]
  %v32 = vld [vmem:[%s2] sm:$0x1]
  %v34 = vlaneseq
  %v35 = vshrl.u32 %v34, 7
  %v36 = vsub.s32 0, %v35
  %v37 = vrot.slane %v32, %v36
  %v55 = vunpack.c.l.b16 %v16
  %v56 = vunpack.c.l.b16 %v17
  %v57 = vunpack.c.l.b16 %v18
  %v58 = vunpack.c.l.b16 %v19
  %v59 = vunpack.c.l.b16 %v20
  %v60 = vunpack.c.l.b16 %v21
  %v61 = vunpack.c.l.b16 %v22
  %v62 = vunpack.c.l.b16 %v23
  %v63 = vunpack.c.l.b16 %v24
  %v64 = vunpack.c.l.b16 %v25
  %v65 = vunpack.c.l.b16 %v26
  %v66 = vunpack.c.l.b16 %v27
  %v67 = vunpack.c.l.b16 %v28
  %v68 = vunpack.c.l.b16 %v29
  %v69 = vunpack.c.l.b16 %v30
  %v70 = vunpack.c.l.b16 %v31
  %v71 = vpack.c.b16 %v56, %v55
  %v72 = vpack.c.b16 %v58, %v57
  %v73 = vpack.c.b16 %v60, %v59
  %v74 = vpack.c.b16 %v62, %v61
  %v75 = vpack.c.b16 %v64, %v63
  %v76 = vpack.c.b16 %v66, %v65
  %v77 = vpack.c.b16 %v68, %v67
  %v78 = vpack.c.b16 %v70, %v69
  %87 = vmatprep.subr.bf16.mxu0 0
  %88 = vmatpush1.bf16.msra.mxu0 %v71
  %89 = vmatprep.subr.bf16.mxu0 0
  %90 = vmatpush1.bf16.msra.mxu0 %v72
  %91 = vmatprep.subr.bf16.mxu0 0
  %92 = vmatpush1.bf16.msra.mxu0 %v73
  %93 = vmatprep.subr.bf16.mxu0 0
  %94 = vmatpush1.bf16.msra.mxu0 %v74
  %95 = vmatprep.subr.bf16.mxu0 0
  %96 = vmatpush1.bf16.msra.mxu0 %v75
  %97 = vmatprep.subr.bf16.mxu0 0
  %98 = vmatpush1.bf16.msra.mxu0 %v76
  %99 = vmatprep.subr.bf16.mxu0 0
  %100 = vmatpush1.bf16.msra.mxu0 %v77
  %101 = vmatprep.subr.bf16.mxu0 0
  %102 = vmatpush1.bf16.msra.mxu0 %v78
  %103 = vmatprep.subr.bf16.mxu0 0
  %104 = vmatpush1.bf16.msra.mxu0 0
  %105 = vmatprep.subr.bf16.mxu0 0
  %106 = vmatpush1.bf16.msra.mxu0 0
  %107 = vmatprep.subr.bf16.mxu0 0
  %108 = vmatpush1.bf16.msra.mxu0 0
  %109 = vmatprep.subr.bf16.mxu0 0
  %110 = vmatpush1.bf16.msra.mxu0 0
  %111 = vmatprep.subr.bf16.mxu0 0
  %112 = vmatpush1.bf16.msra.mxu0 0
  %113 = vmatprep.subr.bf16.mxu0 0
  %114 = vmatpush1.bf16.msra.mxu0 0
  %115 = vmatprep.subr.bf16.mxu0 0
  %116 = vmatpush1.bf16.msra.mxu0 0
  %117 = vmatprep.subr.bf16.mxu0 0
  %118 = vmatpush1.bf16.msra.mxu0 0
  %119 = vmatprep.mubr.bf16.mxu0 0
  %120 = vmatmul.mubr.bf16.gmra.mrb[0].mxu0 %v15
  %v121 = vpop.f32.mrb[0].mxu0
  %v122 = vadd.f32 %v37, %v121
  %v123 = vpop.f32.mrb[0].mxu0
  %v124 = vpop.f32.mrb[0].mxu0
  %v125 = vpop.f32.mrb[0].mxu0
  %126 = vdwg.mxu0
  %v127 = vmax.f32 %v122, 0.0
  %128 = vst [vmem:[%s3] sm:$0xff] %v127
  // Predicated region
  $region14: #{_lambda_.6} parent=0 // pred_check
    _
  $region15: #{_lambda_.6} parent=0 // pred_check_branch
    %130 = sbr.rel (0) target = $region17
  $region16: #{_lambda_.6} parent=0 // pred_region
    _
  $region17: #{_lambda_.6} parent=0 // pred_fallthru
    _
  // Predicated region
  $region18: #{_lambda_.6} parent=0 // pred_check
    _
  $region19: #{_lambda_.6} parent=0 // pred_check_branch
    %132 = sbr.rel (0) target = $region21
  $region20: #{_lambda_.6} parent=0 // pred_region
    _
  $region21: #{_lambda_.6} parent=0 // pred_fallthru
    _

// kernel: _lambda_.7
$region0: #{_lambda_.7}
  #allocation0 [shape = 'u32[]', space=smem, size = 0x4, offset = 0x4, fixed_abs, tag = 'smem constant byte address 0x4 - core index']
  #allocation1 [shape = 'u32[144,128]{1,0:T(1,128)}', space=vmem, size = 0x12000, scoped, tag = 'internal scratch']
  %s0 = inlined_call_operand.vmem [shape: bf16[8,128], index: 0, kind: input, shape index: {}]
  %s1 = inlined_call_operand.vmem [shape: bf16[128,128], index: 1, kind: input, shape index: {}]
  %s2 = inlined_call_operand.vmem [shape: f32[1,128], index: 2, kind: input, shape index: {}]
  %s3 = inlined_call_operand.vmem [shape: f32[8,128], index: 3, kind: output, shape index: {}]
  %s4 = sld [smem:[#allocation0]]
  $region22: #{_lambda_.7} parent=0
    _
  %s6 = ssub.s32 1, %s4
  %s7 = scalar_select 0, %s6, %s4
  // Predicated region
  $region2: #{_lambda_.7} parent=0 // pred_check
    _
  $region3: #{_lambda_.7} parent=0 // pred_check_branch
    %9 = sbr.rel (0) target = $region5
  $region4: #{_lambda_.7} parent=0 // pred_region
    _
  $region5: #{_lambda_.7} parent=0 // pred_fallthru
    _
  // Predicated region
  $region6: #{_lambda_.7} parent=0 // pred_check
    _
  $region7: #{_lambda_.7} parent=0 // pred_check_branch
    %11 = sbr.rel (0) target = $region9
  $region8: #{_lambda_.7} parent=0 // pred_region
    _
  $region9: #{_lambda_.7} parent=0 // pred_fallthru
    _
  // Predicated region
  $region10: #{_lambda_.7} parent=0 // pred_check
    _
  $region11: #{_lambda_.7} parent=0 // pred_check_branch
    %13 = sbr.rel (0) target = $region13
  $region12: #{_lambda_.7} parent=0 // pred_region
    _
  $region13: #{_lambda_.7} parent=0 // pred_fallthru
    _
  %v15 = vld [vmem:[%s0] sm:$0xf]
  %v16 = vld [vmem:[%s1] sm:$0xf]
  %v17 = vld [vmem:[%s1 + $0x4] sm:$0xf]
  %v18 = vld [vmem:[%s1 + $0x8] sm:$0xf]
  %v19 = vld [vmem:[%s1 + $0xc] sm:$0xf]
  %v20 = vld [vmem:[%s1 + $0x10] sm:$0xf]
  %v21 = vld [vmem:[%s1 + $0x14] sm:$0xf]
  %v22 = vld [vmem:[%s1 + $0x18] sm:$0xf]
  %v23 = vld [vmem:[%s1 + $0x1c] sm:$0xf]
  %v24 = vld [vmem:[%s1 + $0x20] sm:$0xf]
  %v25 = vld [vmem:[%s1 + $0x24] sm:$0xf]
  %v26 = vld [vmem:[%s1 + $0x28] sm:$0xf]
  %v27 = vld [vmem:[%s1 + $0x2c] sm:$0xf]
  %v28 = vld [vmem:[%s1 + $0x30] sm:$0xf]
  %v29 = vld [vmem:[%s1 + $0x34] sm:$0xf]
  %v30 = vld [vmem:[%s1 + $0x38] sm:$0xf]
  %v31 = vld [vmem:[%s1 + $0x3c] sm:$0xf]
  %v32 = vld [vmem:[%s2] sm:$0x1]
  %v34 = vlaneseq
  %v35 = vshrl.u32 %v34, 7
  %v36 = vsub.s32 0, %v35
  %v37 = vrot.slane %v32, %v36
  %v55 = vunpack.c.l.b16 %v16
  %v56 = vunpack.c.l.b16 %v17
  %v57 = vunpack.c.l.b16 %v18
  %v58 = vunpack.c.l.b16 %v19
  %v59 = vunpack.c.l.b16 %v20
  %v60 = vunpack.c.l.b16 %v21
  %v61 = vunpack.c.l.b16 %v22
  %v62 = vunpack.c.l.b16 %v23
  %v63 = vunpack.c.l.b16 %v24
  %v64 = vunpack.c.l.b16 %v25
  %v65 = vunpack.c.l.b16 %v26
  %v66 = vunpack.c.l.b16 %v27
  %v67 = vunpack.c.l.b16 %v28
  %v68 = vunpack.c.l.b16 %v29
  %v69 = vunpack.c.l.b16 %v30
  %v70 = vunpack.c.l.b16 %v31
  %v71 = vpack.c.b16 %v56, %v55
  %v72 = vpack.c.b16 %v58, %v57
  %v73 = vpack.c.b16 %v60, %v59
  %v74 = vpack.c.b16 %v62, %v61
  %v75 = vpack.c.b16 %v64, %v63
  %v76 = vpack.c.b16 %v66, %v65
  %v77 = vpack.c.b16 %v68, %v67
  %v78 = vpack.c.b16 %v70, %v69
  %87 = vmatprep.subr.bf16.mxu0 0
  %88 = vmatpush1.bf16.msra.mxu0 %v71
  %89 = vmatprep.subr.bf16.mxu0 0
  %90 = vmatpush1.bf16.msra.mxu0 %v72
  %91 = vmatprep.subr.bf16.mxu0 0
  %92 = vmatpush1.bf16.msra.mxu0 %v73
  %93 = vmatprep.subr.bf16.mxu0 0
  %94 = vmatpush1.bf16.msra.mxu0 %v74
  %95 = vmatprep.subr.bf16.mxu0 0
  %96 = vmatpush1.bf16.msra.mxu0 %v75
  %97 = vmatprep.subr.bf16.mxu0 0
  %98 = vmatpush1.bf16.msra.mxu0 %v76
  %99 = vmatprep.subr.bf16.mxu0 0
  %100 = vmatpush1.bf16.msra.mxu0 %v77
  %101 = vmatprep.subr.bf16.mxu0 0
  %102 = vmatpush1.bf16.msra.mxu0 %v78
  %103 = vmatprep.subr.bf16.mxu0 0
  %104 = vmatpush1.bf16.msra.mxu0 0
  %105 = vmatprep.subr.bf16.mxu0 0
  %106 = vmatpush1.bf16.msra.mxu0 0
  %107 = vmatprep.subr.bf16.mxu0 0
  %108 = vmatpush1.bf16.msra.mxu0 0
  %109 = vmatprep.subr.bf16.mxu0 0
  %110 = vmatpush1.bf16.msra.mxu0 0
  %111 = vmatprep.subr.bf16.mxu0 0
  %112 = vmatpush1.bf16.msra.mxu0 0
  %113 = vmatprep.subr.bf16.mxu0 0
  %114 = vmatpush1.bf16.msra.mxu0 0
  %115 = vmatprep.subr.bf16.mxu0 0
  %116 = vmatpush1.bf16.msra.mxu0 0
  %117 = vmatprep.subr.bf16.mxu0 0
  %118 = vmatpush1.bf16.msra.mxu0 0
  %119 = vmatprep.mubr.bf16.mxu0 0
  %120 = vmatmul.mubr.bf16.gmra.mrb[0].mxu0 %v15
  %v121 = vpop.f32.mrb[0].mxu0
  %v122 = vadd.f32 %v37, %v121
  %v123 = vpop.f32.mrb[0].mxu0
  %v124 = vpop.f32.mrb[0].mxu0
  %v125 = vpop.f32.mrb[0].mxu0
  %126 = vdwg.mxu0
  %127 = vst [vmem:[%s3] sm:$0xff] %v122
  // Predicated region
  $region14: #{_lambda_.7} parent=0 // pred_check
    _
  $region15: #{_lambda_.7} parent=0 // pred_check_branch
    %129 = sbr.rel (0) target = $region17
  $region16: #{_lambda_.7} parent=0 // pred_region
    _
  $region17: #{_lambda_.7} parent=0 // pred_fallthru
    _
  // Predicated region
  $region18: #{_lambda_.7} parent=0 // pred_check
    _
  $region19: #{_lambda_.7} parent=0 // pred_check_branch
    %131 = sbr.rel (0) target = $region21
  $region20: #{_lambda_.7} parent=0 // pred_region
    _
  $region21: #{_lambda_.7} parent=0 // pred_fallthru
    _

// kernel: _lambda_.9
$region0: #{_lambda_.9}
  #allocation0 [shape = 'u32[]', space=smem, size = 0x4, offset = 0x4, fixed_abs, tag = 'smem constant byte address 0x4 - core index']
  #allocation1 [shape = 'u32[144,128]{1,0:T(1,128)}', space=vmem, size = 0x12000, scoped, tag = 'internal scratch']
  %s0 = inlined_call_operand.vmem [shape: bf16[16,128], index: 0, kind: input, shape index: {}]
  %s1 = inlined_call_operand.vmem [shape: bf16[128,128], index: 1, kind: input, shape index: {}]
  %s2 = inlined_call_operand.vmem [shape: f32[1,128], index: 2, kind: input, shape index: {}]
  %s3 = inlined_call_operand.vmem [shape: f32[16,128], index: 3, kind: output, shape index: {}]
  %s4 = sld [smem:[#allocation0]]
  $region22: #{_lambda_.9} parent=0
    _
  %s6 = ssub.s32 1, %s4
  %s7 = scalar_select 0, %s6, %s4
  // Predicated region
  $region2: #{_lambda_.9} parent=0 // pred_check
    _
  $region3: #{_lambda_.9} parent=0 // pred_check_branch
    %9 = sbr.rel (0) target = $region5
  $region4: #{_lambda_.9} parent=0 // pred_region
    _
  $region5: #{_lambda_.9} parent=0 // pred_fallthru
    _
  // Predicated region
  $region6: #{_lambda_.9} parent=0 // pred_check
    _
  $region7: #{_lambda_.9} parent=0 // pred_check_branch
    %11 = sbr.rel (0) target = $region9
  $region8: #{_lambda_.9} parent=0 // pred_region
    _
  $region9: #{_lambda_.9} parent=0 // pred_fallthru
    _
  // Predicated region
  $region10: #{_lambda_.9} parent=0 // pred_check
    _
  $region11: #{_lambda_.9} parent=0 // pred_check_branch
    %13 = sbr.rel (0) target = $region13
  $region12: #{_lambda_.9} parent=0 // pred_region
    _
  $region13: #{_lambda_.9} parent=0 // pred_fallthru
    _
  %v15 = vld [vmem:[%s0] sm:$0xf]
  %v16 = vld [vmem:[%s0 + $0x4] sm:$0xf]
  %v17 = vld [vmem:[%s1] sm:$0xf]
  %v18 = vld [vmem:[%s1 + $0x4] sm:$0xf]
  %v19 = vld [vmem:[%s1 + $0x8] sm:$0xf]
  %v20 = vld [vmem:[%s1 + $0xc] sm:$0xf]
  %v21 = vld [vmem:[%s1 + $0x10] sm:$0xf]
  %v22 = vld [vmem:[%s1 + $0x14] sm:$0xf]
  %v23 = vld [vmem:[%s1 + $0x18] sm:$0xf]
  %v24 = vld [vmem:[%s1 + $0x1c] sm:$0xf]
  %v25 = vld [vmem:[%s1 + $0x20] sm:$0xf]
  %v26 = vld [vmem:[%s1 + $0x24] sm:$0xf]
  %v27 = vld [vmem:[%s1 + $0x28] sm:$0xf]
  %v28 = vld [vmem:[%s1 + $0x2c] sm:$0xf]
  %v29 = vld [vmem:[%s1 + $0x30] sm:$0xf]
  %v30 = vld [vmem:[%s1 + $0x34] sm:$0xf]
  %v31 = vld [vmem:[%s1 + $0x38] sm:$0xf]
  %v32 = vld [vmem:[%s1 + $0x3c] sm:$0xf]
  %v33 = vld [vmem:[%s2] sm:$0x1]
  %v35 = vlaneseq
  %v36 = vshrl.u32 %v35, 7
  %v37 = vsub.s32 0, %v36
  %v38 = vrot.slane %v33, %v37
  %v42 = vunpack.c.l.b16 %v15
  %v43 = vunpack.c.l.b16 %v16
  %v44 = vpack.c.b16 %v43, %v42
  %v62 = vunpack.c.l.b16 %v17
  %v63 = vunpack.c.l.b16 %v18
  %v64 = vunpack.c.l.b16 %v19
  %v65 = vunpack.c.l.b16 %v20
  %v66 = vunpack.c.l.b16 %v21
  %v67 = vunpack.c.l.b16 %v22
  %v68 = vunpack.c.l.b16 %v23
  %v69 = vunpack.c.l.b16 %v24
  %v70 = vunpack.c.l.b16 %v25
  %v71 = vunpack.c.l.b16 %v26
  %v72 = vunpack.c.l.b16 %v27
  %v73 = vunpack.c.l.b16 %v28
  %v74 = vunpack.c.l.b16 %v29
  %v75 = vunpack.c.l.b16 %v30
  %v76 = vunpack.c.l.b16 %v31
  %v77 = vunpack.c.l.b16 %v32
  %v78 = vpack.c.b16 %v63, %v62
  %v79 = vpack.c.b16 %v65, %v64
  %v80 = vpack.c.b16 %v67, %v66
  %v81 = vpack.c.b16 %v69, %v68
  %v82 = vpack.c.b16 %v71, %v70
  %v83 = vpack.c.b16 %v73, %v72
  %v84 = vpack.c.b16 %v75, %v74
  %v85 = vpack.c.b16 %v77, %v76
  %94 = vmatprep.subr.bf16.mxu0 0
  %95 = vmatpush1.bf16.msra.mxu0 %v78
  %96 = vmatprep.subr.bf16.mxu0 0
  %97 = vmatpush1.bf16.msra.mxu0 %v79
  %98 = vmatprep.subr.bf16.mxu0 0
  %99 = vmatpush1.bf16.msra.mxu0 %v80
  %100 = vmatprep.subr.bf16.mxu0 0
  %101 = vmatpush1.bf16.msra.mxu0 %v81
  %102 = vmatprep.subr.bf16.mxu0 0
  %103 = vmatpush1.bf16.msra.mxu0 %v82
  %104 = vmatprep.subr.bf16.mxu0 0
  %105 = vmatpush1.bf16.msra.mxu0 %v83
  %106 = vmatprep.subr.bf16.mxu0 0
  %107 = vmatpush1.bf16.msra.mxu0 %v84
  %108 = vmatprep.subr.bf16.mxu0 0
  %109 = vmatpush1.bf16.msra.mxu0 %v85
  %110 = vmatprep.subr.bf16.mxu0 0
  %111 = vmatpush1.bf16.msra.mxu0 0
  %112 = vmatprep.subr.bf16.mxu0 0
  %113 = vmatpush1.bf16.msra.mxu0 0
  %114 = vmatprep.subr.bf16.mxu0 0
  %115 = vmatpush1.bf16.msra.mxu0 0
  %116 = vmatprep.subr.bf16.mxu0 0
  %117 = vmatpush1.bf16.msra.mxu0 0
  %118 = vmatprep.subr.bf16.mxu0 0
  %119 = vmatpush1.bf16.msra.mxu0 0
  %120 = vmatprep.subr.bf16.mxu0 0
  %121 = vmatpush1.bf16.msra.mxu0 0
  %122 = vmatprep.subr.bf16.mxu0 0
  %123 = vmatpush1.bf16.msra.mxu0 0
  %124 = vmatprep.subr.bf16.mxu0 0
  %125 = vmatpush1.bf16.msra.mxu0 0
  %126 = vmatprep.mubr.bf16.mxu0 0
  %127 = vmatmul.mubr.bf16.gmra.mrb[0].mxu0 %v44
  %v128 = vpop.f32.mrb[0].mxu0
  %v129 = vadd.f32 %v38, %v128
  %v130 = vpop.f32.mrb[0].mxu0
  %v131 = vpop.f32.mrb[0].mxu0
  %v132 = vadd.f32 %v38, %v131
  %v133 = vpop.f32.mrb[0].mxu0
  %134 = vdwg.mxu0
  %135 = vst [vmem:[%s3] sm:$0xff] %v129
  %136 = vst [vmem:[%s3 + $0x8] sm:$0xff] %v132
  // Predicated region
  $region14: #{_lambda_.9} parent=0 // pred_check
    _
  $region15: #{_lambda_.9} parent=0 // pred_check_branch
    %138 = sbr.rel (0) target = $region17
  $region16: #{_lambda_.9} parent=0 // pred_region
    _
  $region17: #{_lambda_.9} parent=0 // pred_fallthru
    _
  // Predicated region
  $region18: #{_lambda_.9} parent=0 // pred_check
    _
  $region19: #{_lambda_.9} parent=0 // pred_check_branch
    %140 = sbr.rel (0) target = $region21
  $region20: #{_lambda_.9} parent=0 // pred_region
    _
  $region21: #{_lambda_.9} parent=0 // pred_fallthru
    _

</llo_original>
